<compile_context>
chip_gen: v7x
topology: tpu7x:2x2x1
jax: 0.10.0
libtpu: 0.0.40
codegen_flags: <defaults>
</compile_context>

<pallas_src>
import math
from functools import partial

import jax
import jax.numpy as jnp
from jax.experimental import pallas as pl
from jax.experimental.pallas import tpu as pltpu


# ----------------------------------------------------------------------------
# Pallas kernels
# ----------------------------------------------------------------------------
def _dense_kernel(x_ref, wt_ref, b_ref, o_ref):
    # x: (TN, Fin), wt: (Fin, Fout) (pre-transposed W), b: (1, Fout)
    o_ref[...] = (
        jnp.dot(x_ref[...], wt_ref[...], preferred_element_type=jnp.float32)
        + b_ref[...]
    ).astype(o_ref.dtype)


def _qproj_kernel(x_ref, wt_ref, bu_ref, bv_ref, qu_ref, qv_ref, *, scale):
    # One matmul, two biased+scaled outputs:
    #   q_u = (x @ Wq^T + bq + pos_bias_u) * scale
    #   q_v = (x @ Wq^T + bq + pos_bias_v) * scale
    xw = jnp.dot(x_ref[...], wt_ref[...], preferred_element_type=jnp.float32)
    qu_ref[...] = ((xw + bu_ref[...]) * scale).astype(qu_ref.dtype)
    qv_ref[...] = ((xw + bv_ref[...]) * scale).astype(qv_ref.dtype)


def _pick_row_tile(n, target=512):
    """Largest row tile <= target that evenly divides n (multiple of 8)."""
    if n <= target:
        return n
    for t in (512, 256, 128, 64, 32, 16, 8):
        if n % t == 0:
            return t
    return n  # fallback: single block


def dense(x, wt, b, *, row_tile=512):
    """y = x @ wt + b, row-tiled with a parallel grid; wt/bias stay resident."""
    N, Fin = x.shape
    Fout = wt.shape[1]
    tn = _pick_row_tile(N, row_tile)
    b2 = b.reshape(1, Fout)
    return pl.pallas_call(
        _dense_kernel,
        out_shape=jax.ShapeDtypeStruct((N, Fout), x.dtype),
        grid=(N // tn,),
        in_specs=[
            pl.BlockSpec((tn, Fin), lambda i: (i, 0)),
            pl.BlockSpec((Fin, Fout), lambda i: (0, 0)),
            pl.BlockSpec((1, Fout), lambda i: (0, 0)),
        ],
        out_specs=pl.BlockSpec((tn, Fout), lambda i: (i, 0)),
        compiler_params=pltpu.CompilerParams(dimension_semantics=("parallel",)),
    )(x, wt, b2)


def qproj(x, wt, bu, bv, scale, *, row_tile=512):
    """(q_u, q_v) = ((x @ wt + bu) * s, (x @ wt + bv) * s), one pass over x/wt."""
    N, Fin = x.shape
    Fout = wt.shape[1]
    tn = _pick_row_tile(N, row_tile)
    return pl.pallas_call(
        partial(_qproj_kernel, scale=scale),
        out_shape=(
            jax.ShapeDtypeStruct((N, Fout), x.dtype),
            jax.ShapeDtypeStruct((N, Fout), x.dtype),
        ),
        grid=(N // tn,),
        in_specs=[
            pl.BlockSpec((tn, Fin), lambda i: (i, 0)),
            pl.BlockSpec((Fin, Fout), lambda i: (0, 0)),
            pl.BlockSpec((1, Fout), lambda i: (0, 0)),
            pl.BlockSpec((1, Fout), lambda i: (0, 0)),
        ],
        out_specs=(
            pl.BlockSpec((tn, Fout), lambda i: (i, 0)),
            pl.BlockSpec((tn, Fout), lambda i: (i, 0)),
        ),
        compiler_params=pltpu.CompilerParams(dimension_semantics=("parallel",)),
    )(x, wt, bu.reshape(1, Fout), bv.reshape(1, Fout))


def _bd_pad_kernel(qv_ref, p_ref, o_ref):
    # blocks: qv (1, HT, T1, d_k), p (1, HT, Tp, d_k) -> o (1, HT, T1, Tp+1)
    # The bd matmul result goes into lanes [0, Tp); lane Tp holds the zero pad
    # column, so the XLA-side rel_shift becomes a single flat slice.
    bd = jnp.einsum(
        "hqd,hkd->hqk", qv_ref[0], p_ref[0], preferred_element_type=jnp.float32
    )
    ht, t1, tp = bd.shape
    o_ref[0] = jnp.zeros((ht, t1, tp + 1), jnp.float32)   # aligned full store
    o_ref[0, :, :, 0:tp] = bd                             # aligned partial store


def _attn_kernel(qu_ref, k_ref, bd_ref, mask_ref, v_ref, o_ref, *, min_value):
    # Fused: ac = q_u k^T (kept in VMEM), scores = ac + rel-shifted bd,
    # mask -> softmax -> zero-fill -> attn @ v.  q_u / bd are pre-scaled.
    qu = qu_ref[0]                                            # (HT, T1, d_k)
    k = k_ref[0]                                              # (HT, T2, d_k)
    ac = jnp.einsum("hqd,hkd->hqk", qu, k, preferred_element_type=jnp.float32)
    scores = ac + bd_ref[0]                                   # (HT, T1, T2)
    neg = mask_ref[0] == 0                                    # (M1, T2), M1 in {1, T1}
    scores = jnp.where(neg, min_value, scores)
    m = jnp.max(scores, axis=-1, keepdims=True)
    e = jnp.exp(scores - m)
    s = jnp.sum(e, axis=-1, keepdims=True)
    attn = e * pl.reciprocal(s, approx=True)
    attn = jnp.where(neg, 0.0, attn)
    # TODO(synk): dropout is identity here (inference / dropout_rate == 0.0)
    o_ref[0] = jnp.einsum(
        "hqk,hkd->hqd", attn, v_ref[0], preferred_element_type=jnp.float32
    ).astype(o_ref.dtype)


# ----------------------------------------------------------------------------
# JAX glue
# ----------------------------------------------------------------------------
def rel_shift(x, zero_triu=False):
    """Exact port of LegacyRelPositionMultiHeadedAttention.rel_shift (ref path)."""
    B, H, T1, P = x.shape
    zero_pad = jnp.zeros((B, H, T1, 1), x.dtype)
    x_padded = jnp.concatenate([zero_pad, x], axis=-1)        # (B,H,T1,P+1)
    x_padded = x_padded.reshape(B, H, P + 1, T1)
    x = x_padded[:, :, 1:].reshape(B, H, T1, P)
    if zero_triu:
        ones = jnp.ones((T1, P), x.dtype)
        x = x * jnp.tril(ones, P - T1)[None, None, :, :]
    return x


def rel_shift_from_end_padded(x_pad, zero_triu=False):
    """rel_shift given bd already end-padded with one zero column per row.

    With per-row layout [bd_row, 0] (length P+1), the legacy rel_shift equals
    taking the row-major flat buffer and slicing [T1-1 : T1-1 + T1*P].
    Single copy in XLA (the reshapes are free / contiguous).
    """
    B, H, T1, P1 = x_pad.shape
    P = P1 - 1
    flat = x_pad.reshape(B, H, T1 * P1)
    x = flat[:, :, T1 - 1: T1 - 1 + T1 * P].reshape(B, H, T1, P)
    if zero_triu:
        ones = jnp.ones((T1, P), x.dtype)
        x = x * jnp.tril(ones, P - T1)[None, None, :, :]
    return x


def _pick_head_tile(h, t1, t2, budget_bytes=4 << 20):
    """Heads per grid step such that one f32 score block stays <= budget."""
    per_head = t1 * t2 * 4
    ht = max(1, min(h, budget_bytes // max(per_head, 1)))
    while h % ht:
        ht -= 1
    return ht


def forward(params, query, key_, value, pos_emb, mask, n_head, zero_triu=False):
    B, T1, F = query.shape
    T2 = key_.shape[1]
    h = n_head
    d_k = F // h
    scale = 1.0 / math.sqrt(d_k)

    # torch Linear weight layout is (Fout, Fin): transpose once, reuse everywhere.
    wq_t = params["wq"].T
    wk_t = params["wk"].T
    wv_t = params["wv"].T
    wo_t = params["wo"].T
    wpos_t = params["wpos"].T

    def proj(x, wt, b):
        n, t, _ = x.shape
        return dense(x.reshape(n * t, F), wt, b).reshape(n, t, F)

    # q projection fused with pos_bias_u / pos_bias_v add and 1/sqrt(d_k) scale
    # (pos_bias is (h, d_k) -> contiguous (F,) row since F index = head*d_k + d).
    bu = params["bq"] + params["pos_bias_u"].reshape(F)
    bv = params["bq"] + params["pos_bias_v"].reshape(F)
    qu2d, qv2d = qproj(query.reshape(B * T1, F), wq_t, bu, bv, scale)

    k = proj(key_, wk_t, params["bk"])
    v = proj(value, wv_t, params["bv"])
    Bp, Tp, _ = pos_emb.shape
    p = proj(pos_emb, wpos_t, jnp.zeros((F,), jnp.float32))   # linear_pos: no bias

    # Head split kept as a small O(B*T*F) XLA relayout so every Pallas block
    # keeps full (T, d_k) trailing dims (always legal layout for any d_k).
    q_u = qu2d.reshape(B, T1, h, d_k).transpose(0, 2, 1, 3)
    q_v = qv2d.reshape(B, T1, h, d_k).transpose(0, 2, 1, 3)
    k4 = k.reshape(B, T2, h, d_k).transpose(0, 2, 1, 3)
    v4 = v.reshape(B, T2, h, d_k).transpose(0, 2, 1, 3)
    p4 = p.reshape(Bp, Tp, h, d_k).transpose(0, 2, 1, 3)

    assert Tp == T2, "legacy rel-pos attention requires pos length == time2"
    HT = _pick_head_tile(h, T1, T2)
    G = h // HT

    pos_map = (lambda b, g: (0, g, 0, 0)) if Bp == 1 else (lambda b, g: (b, g, 0, 0))
    bd_pad = pl.pallas_call(
        _bd_pad_kernel,
        out_shape=jax.ShapeDtypeStruct((B, h, T1, Tp + 1), jnp.float32),
        grid=(B, G),
        in_specs=[
            pl.BlockSpec((1, HT, T1, d_k), lambda b, g: (b, g, 0, 0)),
            pl.BlockSpec((1, HT, Tp, d_k), pos_map),
        ],
        out_specs=pl.BlockSpec((1, HT, T1, Tp + 1), lambda b, g: (b, g, 0, 0)),
        compiler_params=pltpu.CompilerParams(
            dimension_semantics=("parallel", "parallel")),
    )(q_v, p4)

    # Pure data re-indexing glue on bd only (single XLA slice copy).
    bd = rel_shift_from_end_padded(bd_pad, zero_triu)

    min_value = float(jnp.finfo(jnp.float32).min)
    if mask is None:
        mask = jnp.ones((B, 1, T2), jnp.bool_)
    mask_i = mask.astype(jnp.int32)     # (B, 1, T2) or (B, T1, T2)
    M1 = mask_i.shape[1]

    ctx = pl.pallas_call(
        partial(_attn_kernel, min_value=min_value),
        out_shape=jax.ShapeDtypeStruct((B, h, T1, d_k), jnp.float32),
        grid=(B, G),
        in_specs=[
            pl.BlockSpec((1, HT, T1, d_k), lambda b, g: (b, g, 0, 0)),   # q_u
            pl.BlockSpec((1, HT, T2, d_k), lambda b, g: (b, g, 0, 0)),   # k
            pl.BlockSpec((1, HT, T1, T2), lambda b, g: (b, g, 0, 0)),    # bd (shifted)
            pl.BlockSpec((1, M1, T2), lambda b, g: (b, 0, 0)),           # mask
            pl.BlockSpec((1, HT, T2, d_k), lambda b, g: (b, g, 0, 0)),   # v
        ],
        out_specs=pl.BlockSpec((1, HT, T1, d_k), lambda b, g: (b, g, 0, 0)),
        compiler_params=pltpu.CompilerParams(
            dimension_semantics=("parallel", "parallel")),
    )(q_u, k4, bd, mask_i, v4)

    x = ctx.transpose(0, 2, 1, 3).reshape(B * T1, F)
    out = dense(x, wo_t, params["bo"]).reshape(B, T1, F)
    return out


# ----------------------------------------------------------------------------
# Deterministic parameter init (shapes match the torch module's __init__)
# ----------------------------------------------------------------------------
def init_params(key, n_head, n_feat):
    d_k = n_feat // n_head
    ks = jax.random.split(key, 11)

    def lin_w(k, fan_out, fan_in):
        bound = 1.0 / math.sqrt(fan_in)
        return jax.random.uniform(k, (fan_out, fan_in), jnp.float32, -bound, bound)

    def lin_b(k, fan_out, fan_in):
        bound = 1.0 / math.sqrt(fan_in)
        return jax.random.uniform(k, (fan_out,), jnp.float32, -bound, bound)

    xav = math.sqrt(6.0 / (n_head + d_k))  # xavier_uniform on (h, d_k)
    return dict(
        wq=lin_w(ks[0], n_feat, n_feat), bq=lin_b(ks[1], n_feat, n_feat),
        wk=lin_w(ks[2], n_feat, n_feat), bk=lin_b(ks[3], n_feat, n_feat),
        wv=lin_w(ks[4], n_feat, n_feat), bv=lin_b(ks[5], n_feat, n_feat),
        wo=lin_w(ks[6], n_feat, n_feat), bo=lin_b(ks[7], n_feat, n_feat),
        wpos=lin_w(ks[8], n_feat, n_feat),  # linear_pos has no bias
        pos_bias_u=jax.random.uniform(ks[9], (n_head, d_k), jnp.float32, -xav, xav),
        pos_bias_v=jax.random.uniform(ks[10], (n_head, d_k), jnp.float32, -xav, xav),
    )


# ----------------------------------------------------------------------------
# Pure-JAX reference (mirror of the PyTorch forward) for validation
# ----------------------------------------------------------------------------
def ref_forward(params, query, key_, value, pos_emb, mask, n_head, zero_triu=False):
    hp = jax.lax.Precision.HIGHEST
    B, T1, F = query.shape
    T2 = key_.shape[1]
    h = n_head
    d_k = F // h

    def lin(x, w, b):
        return jnp.einsum("btf,gf->btg", x, w, precision=hp) + b

    q = lin(query, params["wq"], params["bq"]).reshape(B, T1, h, d_k).transpose(0, 2, 1, 3)
    k = lin(key_, params["wk"], params["bk"]).reshape(B, T2, h, d_k).transpose(0, 2, 1, 3)
    v = lin(value, params["wv"], params["bv"]).reshape(B, T2, h, d_k).transpose(0, 2, 1, 3)
    Bp, Tp, _ = pos_emb.shape
    p = jnp.einsum("btf,gf->btg", pos_emb, params["wpos"], precision=hp).reshape(
        Bp, Tp, h, d_k
    ).transpose(0, 2, 1, 3)
    p = jnp.broadcast_to(p, (B, h, Tp, d_k))

    q_u = q + params["pos_bias_u"][None, :, None, :]
    q_v = q + params["pos_bias_v"][None, :, None, :]
    ac = jnp.einsum("bhqd,bhkd->bhqk", q_u, k, precision=hp)
    bd = jnp.einsum("bhqd,bhkd->bhqk", q_v, p, precision=hp)
    bd = rel_shift(bd, zero_triu)
    scores = (ac + bd) / math.sqrt(d_k)

    neg = mask[:, None, :, :] == 0  # (B,1,1,T2)
    min_value = float(jnp.finfo(jnp.float32).min)
    scores = jnp.where(neg, min_value, scores)
    attn = jax.nn.softmax(scores, axis=-1)
    attn = jnp.where(neg, 0.0, attn)
    x = jnp.einsum("bhqk,bhkd->bhqd", attn, v, precision=hp)
    x = x.transpose(0, 2, 1, 3).reshape(B, T1, F)
    return jnp.einsum("btf,gf->btg", x, params["wo"], precision=hp) + params["bo"]


# ----------------------------------------------------------------------------
if __name__ == "__main__":
    n_head, n_feat = 4, 32
    B, T = 2, 8

    root = jax.random.PRNGKey(0)
    kp, kq, kk, kv, kpos = jax.random.split(root, 5)
    params = init_params(kp, n_head, n_feat)

    query = jax.random.normal(kq, (B, T, n_feat), jnp.float32)
    key_ = jax.random.normal(kk, (B, T, n_feat), jnp.float32)
    value = jax.random.normal(kv, (B, T, n_feat), jnp.float32)
    pos_emb = jax.random.normal(kpos, (1, T, n_feat), jnp.float32)

    lengths = jnp.array([T, T - 2])
    mask = jnp.arange(T)[None, None, :] < lengths[:, None, None]  # (B, 1, T) bool

    out = forward(params, query, key_, value, pos_emb, mask, n_head)
    out = jax.block_until_ready(out)

    ref = ref_forward(params, query, key_, value, pos_emb, mask, n_head)
    assert out.shape == (B, T, n_feat)
    max_err = float(jnp.max(jnp.abs(out - ref)))
    assert jnp.allclose(out, ref, rtol=1e-2, atol=1e-2), max_err

    print("KERNEL_OK")
</pallas_src>

<mosaic_0001>
module attributes {stable_mosaic.version = 11 : i64} {
  func.func @_qproj_kernel(%arg0: i32, %arg1: memref<16x32xf32, #tpu.memory_space<vmem>>, %arg2: memref<32x32xf32, #tpu.memory_space<vmem>>, %arg3: memref<1x32xf32, #tpu.memory_space<vmem>>, %arg4: memref<1x32xf32, #tpu.memory_space<vmem>>, %arg5: memref<16x32xf32, #tpu.memory_space<vmem>>, %arg6: memref<16x32xf32, #tpu.memory_space<vmem>>) attributes {dimension_semantics = [#tpu.dimension_semantics<parallel>], iteration_bounds = array<i64: 1>, scalar_prefetch = 0 : i64, scratch_operands = 0 : i64, tpu.core_type = #tpu.core_type<tc>, window_params = [{transform_indices = @transform_0, window_bounds = array<i64: 16, 32>}, {pipeline_mode = #tpu.pipeline_mode<synchronous>, transform_indices = @transform_1, window_bounds = array<i64: 32, 32>}, {pipeline_mode = #tpu.pipeline_mode<synchronous>, transform_indices = @transform_2, window_bounds = array<i64: 1, 32>}, {pipeline_mode = #tpu.pipeline_mode<synchronous>, transform_indices = @transform_3, window_bounds = array<i64: 1, 32>}, {transform_indices = @transform_4, window_bounds = array<i64: 16, 32>}, {transform_indices = @transform_5, window_bounds = array<i64: 16, 32>}]} {
    %c0 = arith.constant 0 : index
    %c0_0 = arith.constant 0 : index
    %0 = vector.load %arg1[%c0, %c0_0] : memref<16x32xf32, #tpu.memory_space<vmem>>, vector<16x32xf32>
    %c0_1 = arith.constant 0 : index
    %c0_2 = arith.constant 0 : index
    %1 = vector.load %arg2[%c0_1, %c0_2] : memref<32x32xf32, #tpu.memory_space<vmem>>, vector<32x32xf32>
    %cst = arith.constant dense<0.000000e+00> : vector<16x32xf32>
    %2 = tpu.matmul %0, %1, %cst {dimension_numbers = #tpu.dot_dimension_numbers<[1], [0], [0], [1], [0, 0, 1, 1], [], []>} : vector<16x32xf32>, vector<32x32xf32>, vector<16x32xf32> -> vector<16x32xf32>
    %c0_3 = arith.constant 0 : index
    %c0_4 = arith.constant 0 : index
    %3 = vector.load %arg3[%c0_3, %c0_4] : memref<1x32xf32, #tpu.memory_space<vmem>>, vector<1x32xf32>
    %4 = vector.broadcast %3 : vector<1x32xf32> to vector<16x32xf32>
    %5 = arith.addf %2, %4 : vector<16x32xf32>
    %cst_5 = arith.constant 0.353553385 : f32
    %6 = vector.broadcast %cst_5 : f32 to vector<16x32xf32>
    %7 = arith.mulf %5, %6 : vector<16x32xf32>
    %c0_6 = arith.constant 0 : index
    %c0_7 = arith.constant 0 : index
    %8 = vector.load %arg5[%c0_6, %c0_7] : memref<16x32xf32, #tpu.memory_space<vmem>>, vector<16x32xf32>
    tpu.vector_store %arg5[%c0_6, %c0_7], %7 {strides = array<i32>} : memref<16x32xf32, #tpu.memory_space<vmem>>, vector<16x32xf32>,
    %c0_8 = arith.constant 0 : index
    %c0_9 = arith.constant 0 : index
    %9 = vector.load %arg4[%c0_8, %c0_9] : memref<1x32xf32, #tpu.memory_space<vmem>>, vector<1x32xf32>
    %10 = vector.broadcast %9 : vector<1x32xf32> to vector<16x32xf32>
    %11 = arith.addf %2, %10 : vector<16x32xf32>
    %cst_10 = arith.constant 0.353553385 : f32
    %12 = vector.broadcast %cst_10 : f32 to vector<16x32xf32>
    %13 = arith.mulf %11, %12 : vector<16x32xf32>
    %c0_11 = arith.constant 0 : index
    %c0_12 = arith.constant 0 : index
    %14 = vector.load %arg6[%c0_11, %c0_12] : memref<16x32xf32, #tpu.memory_space<vmem>>, vector<16x32xf32>
    tpu.vector_store %arg6[%c0_11, %c0_12], %13 {strides = array<i32>} : memref<16x32xf32, #tpu.memory_space<vmem>>, vector<16x32xf32>,
    return
  }
  func.func @transform_0(%arg0: i32) -> (i32, i32) {
    %c0_i32 = arith.constant 0 : i32
    %c0_i32_0 = arith.constant 0 : i32
    return %arg0, %c0_i32 : i32, i32
  }
  func.func @transform_1(%arg0: i32) -> (i32, i32) {
    %c0_i32 = arith.constant 0 : i32
    %c0_i32_0 = arith.constant 0 : i32
    %c0_i32_1 = arith.constant 0 : i32
    return %c0_i32, %c0_i32_0 : i32, i32
  }
  func.func @transform_2(%arg0: i32) -> (i32, i32) {
    %c0_i32 = arith.constant 0 : i32
    %c0_i32_0 = arith.constant 0 : i32
    %c0_i32_1 = arith.constant 0 : i32
    return %c0_i32, %c0_i32_0 : i32, i32
  }
  func.func @transform_3(%arg0: i32) -> (i32, i32) {
    %c0_i32 = arith.constant 0 : i32
    %c0_i32_0 = arith.constant 0 : i32
    %c0_i32_1 = arith.constant 0 : i32
    return %c0_i32, %c0_i32_0 : i32, i32
  }
  func.func @transform_4(%arg0: i32) -> (i32, i32) {
    %c0_i32 = arith.constant 0 : i32
    %c0_i32_0 = arith.constant 0 : i32
    return %arg0, %c0_i32 : i32, i32
  }
  func.func @transform_5(%arg0: i32) -> (i32, i32) {
    %c0_i32 = arith.constant 0 : i32
    %c0_i32_0 = arith.constant 0 : i32
    return %arg0, %c0_i32 : i32, i32
  }
}

</mosaic_0001>

<llo_original>
// kernel: tpu_custom_call.1
$region0: #{tpu_custom_call.1}
  #allocation0 [shape = 'u32[]', space=smem, size = 0x4, offset = 0x4, fixed_abs, tag = 'smem constant byte address 0x4 - core index']
  #allocation1 [shape = 'u32[144,128]{1,0:T(1,128)}', space=vmem, size = 0x12000, scoped, tag = 'internal scratch']
  %s0 = inlined_call_operand.hbm [shape: f32[16,32], index: 0, kind: input, shape index: {}]
  %s1 = inlined_call_operand.hbm [shape: f32[32,32], index: 1, kind: input, shape index: {}]
  %s2 = inlined_call_operand.vmem [shape: f32[1,32], index: 2, kind: input, shape index: {}]
  %s3 = inlined_call_operand.vmem [shape: f32[1,32], index: 3, kind: input, shape index: {}]
  %s4 = inlined_call_operand.hbm [shape: f32[16,32], index: 4, kind: output, shape index: {0}]
  %s5 = inlined_call_operand.hbm [shape: f32[16,32], index: 5, kind: output, shape index: {1}]
  %6 = xla_tuple %s4, %s5
  %s7 = sld [smem:[#allocation0]]
  $region42: #{tpu_custom_call.1} parent=0
    _
  %s9 = ssub.s32 1, %s7
  %s10 = scalar_select 0, %s9, %s7
  $region1: #{tpu_custom_call.1} parent=0
    #allocation2 [shape = 'u8[8192]{0}', space=vmem, size = 0x2000, scoped, tag = 'input window, operand 0, single buffered']
    #allocation3 [shape = 's32[1]{0}', space=sflag, size = 0x4, scoped, tag = 'scoped memory for tpu_custom_call.1']
    #allocation4 [shape = 's32[1]{0}', space=sflag, size = 0x4, scoped, tag = 'scoped memory for tpu_custom_call.1']
    #allocation5 [shape = 'u8[16384]{0}', space=vmem, size = 0x4000, scoped, tag = 'input window, operand 1, single buffered']
    #allocation6 [shape = 's32[1]{0}', space=sflag, size = 0x4, scoped, tag = 'scoped memory for tpu_custom_call.1']
    #allocation7 [shape = 'u8[8192]{0}', space=vmem, size = 0x2000, scoped, tag = 'output window, operand 0, single buffered']
    #allocation8 [shape = 'u8[8192]{0}', space=vmem, size = 0x2000, scoped, tag = 'output window, operand 1, single buffered']
    #allocation9 [shape = 's32[1]{0}', space=sflag, size = 0x4, scoped, tag = 'scoped memory for tpu_custom_call.1']
    %11 = vsyncpa [#allocation3], 0
    %12 = vsyncpa [#allocation6], 0
    %13 = vsyncpa [#allocation4], 0
    %14 = vsyncpa [#allocation9], 0
    // Predicated region
    $region2: #{tpu_custom_call.1} parent=1 // pred_check
      _
    $region3: #{tpu_custom_call.1} parent=1 // pred_check_branch
      %16 = sbr.rel (0) target = $region5
    $region4: #{tpu_custom_call.1} parent=1 // pred_region
      %s18 = ssub.s32 256, 256
      %19 = vsyncadd [#allocation3], %s18
      %s20 = sshll.u32 [#allocation2], 4
      %s21 = int_to_ptr.vmem [resolvable:$true] %s20
      %26 = dma.hbm_to_vmem [thread:$0]  %s0, 256, %s21, [#allocation3], 128, 128, 8
    $region5: #{tpu_custom_call.1} parent=1 // pred_fallthru
      _
    // Predicated region
    $region6: #{tpu_custom_call.1} parent=1 // pred_check
      _
    $region7: #{tpu_custom_call.1} parent=1 // pred_check_branch
      %28 = sbr.rel (0) target = $region9
    $region8: #{tpu_custom_call.1} parent=1 // pred_region
      %s30 = ssub.s32 512, 512
      %31 = vsyncadd [#allocation6], %s30
      %s32 = sshll.u32 [#allocation5], 4
      %s33 = int_to_ptr.vmem [resolvable:$true] %s32
      %38 = dma.hbm_to_vmem [thread:$0]  %s1, 512, %s33, [#allocation6], 128, 128, 8
    $region9: #{tpu_custom_call.1} parent=1 // pred_fallthru
      _
    // Predicated region
    $region10: #{tpu_custom_call.1} parent=1 // pred_check
      _
    $region11: #{tpu_custom_call.1} parent=1 // pred_check_branch
      %40 = sbr.rel (0) target = $region13
    $region12: #{tpu_custom_call.1} parent=1 // pred_region
      _
    $region13: #{tpu_custom_call.1} parent=1 // pred_fallthru
      _
    // Predicated region
    $region14: #{tpu_custom_call.1} parent=1 // pred_check
      _
    $region15: #{tpu_custom_call.1} parent=1 // pred_check_branch
      %42 = sbr.rel (0) target = $region17
    $region16: #{tpu_custom_call.1} parent=1 // pred_region
      _
    $region17: #{tpu_custom_call.1} parent=1 // pred_fallthru
      _
    // Predicated region
    $region18: #{tpu_custom_call.1} parent=1 // pred_check
      _
    $region19: #{tpu_custom_call.1} parent=1 // pred_check_branch
      %44 = sbr.rel (0) target = $region21
    $region20: #{tpu_custom_call.1} parent=1 // pred_region
      %45 = dma.done [#allocation3], 256
    $region21: #{tpu_custom_call.1} parent=1 // pred_fallthru
      _
    // Predicated region
    $region22: #{tpu_custom_call.1} parent=1 // pred_check
      _
    $region23: #{tpu_custom_call.1} parent=1 // pred_check_branch
      %47 = sbr.rel (0) target = $region25
    $region24: #{tpu_custom_call.1} parent=1 // pred_region
      %48 = dma.done [#allocation6], 512
    $region25: #{tpu_custom_call.1} parent=1 // pred_fallthru
      _
    %v49 = vld [vmem:[#allocation2] sm:$0xff]
    %v50 = vld [vmem:[#allocation2 + $0x8] sm:$0xff]
    %v51 = vld [vmem:[#allocation5] sm:$0xff]
    %v52 = vld [vmem:[#allocation5 + $0x8] sm:$0xff]
    %v53 = vld [vmem:[#allocation5 + $0x10] sm:$0xff]
    %v54 = vld [vmem:[#allocation5 + $0x18] sm:$0xff]
    %vm55 = vcmask 261120
    %v57 = vsel %vm55, %v49, 0
    %v60 = vsel %vm55, %v50, 0
    %62 = vmatprep.subr.mxu0 0.0
    %63 = vmatpush1.msra.mxu0 %v51
    %64 = vmatprep.subr.mxu0 0.0
    %65 = vmatpush1.msra.mxu0 %v52
    %66 = vmatprep.subr.mxu0 0.0
    %67 = vmatpush1.msra.mxu0 %v53
    %68 = vmatprep.subr.mxu0 0.0
    %69 = vmatpush1.msra.mxu0 %v54
    %70 = vmatprep.subr.mxu0 0.0
    %71 = vmatpush1.msra.mxu0 0.0
    %72 = vmatprep.subr.mxu0 0.0
    %73 = vmatpush1.msra.mxu0 0.0
    %74 = vmatprep.subr.mxu0 0.0
    %75 = vmatpush1.msra.mxu0 0.0
    %76 = vmatprep.subr.mxu0 0.0
    %77 = vmatpush1.msra.mxu0 0.0
    %78 = vmatprep.subr.mxu0 0.0
    %79 = vmatpush1.msra.mxu0 0.0
    %80 = vmatprep.subr.mxu0 0.0
    %81 = vmatpush1.msra.mxu0 0.0
    %82 = vmatprep.subr.mxu0 0.0
    %83 = vmatpush1.msra.mxu0 0.0
    %84 = vmatprep.subr.mxu0 0.0
    %85 = vmatpush1.msra.mxu0 0.0
    %86 = vmatprep.subr.mxu0 0.0
    %87 = vmatpush1.msra.mxu0 0.0
    %88 = vmatprep.subr.mxu0 0.0
    %89 = vmatpush1.msra.mxu0 0.0
    %90 = vmatprep.subr.mxu0 0.0
    %91 = vmatpush1.msra.mxu0 0.0
    %92 = vmatprep.subr.mxu0 0.0
    %93 = vmatpush1.msra.mxu0 0.0
    %94 = vmatprep.subr.mxu0 0.0
    %95 = vmatpush1.msra.mxu0 0.0
    %96 = vmatprep.subr.mxu0 0.0
    %97 = vmatpush1.msra.mxu0 0.0
    %98 = vmatprep.subr.mxu0 0.0
    %99 = vmatpush1.msra.mxu0 0.0
    %100 = vmatprep.subr.mxu0 0.0
    %101 = vmatpush1.msra.mxu0 0.0
    %102 = vmatprep.subr.mxu0 0.0
    %103 = vmatpush1.msra.mxu0 0.0
    %104 = vmatprep.subr.mxu0 0.0
    %105 = vmatpush1.msra.mxu0 0.0
    %106 = vmatprep.subr.mxu0 0.0
    %107 = vmatpush1.msra.mxu0 0.0
    %108 = vmatprep.subr.mxu0 0.0
    %109 = vmatpush1.msra.mxu0 0.0
    %110 = vmatprep.subr.mxu0 0.0
    %111 = vmatpush1.msra.mxu0 0.0
    %112 = vmatprep.subr.mxu0 0.0
    %113 = vmatpush1.msra.mxu0 0.0
    %114 = vmatprep.subr.mxu0 0.0
    %115 = vmatpush1.msra.mxu0 0.0
    %116 = vmatprep.subr.mxu0 0.0
    %117 = vmatpush1.msra.mxu0 0.0
    %118 = vmatprep.subr.mxu0 0.0
    %119 = vmatpush1.msra.mxu0 0.0
    %120 = vmatprep.subr.mxu0 0.0
    %121 = vmatpush1.msra.mxu0 0.0
    %122 = vmatprep.subr.mxu0 0.0
    %123 = vmatpush1.msra.mxu0 0.0
    %124 = vmatprep.subr.mxu0 0.0
    %125 = vmatpush1.msra.mxu0 0.0
    %126 = vmatprep.mubr.f32.mxu0 0.0
    %127 = vmatmul.mubr.f32.gmra.mrb[0].mxu0 %v57
    %v128 = vpop.f32.mrb[0].mxu0
    %v129 = vadd.f32 0.0, %v128
    %v130 = vpop.f32.mrb[0].mxu0
    %131 = vmatprep.mubr.f32.mxu0 0.0
    %132 = vmatmul.mubr.f32.gmra.mrb[0].mxu0 %v60
    %v133 = vpop.f32.mrb[0].mxu0
    %v134 = vadd.f32 0.0, %v133
    %v135 = vpop.f32.mrb[0].mxu0
    %136 = vdwg.mxu0
    %v137 = vld [vmem:[%s2] sm:$0x1]
    %v139 = vlaneseq
    %v140 = vshrl.u32 %v139, 7
    %v141 = vsub.s32 0, %v140
    %v142 = vrot.slane %v137, %v141
    %v144 = vadd.f32 %v129, %v142
    %v145 = vadd.f32 %v134, %v142
    %v146 = vmul.f32 %v144, 0.35355338
    %v147 = vmul.f32 %v145, 0.35355338
    %148 = vst.msk [vmem:[#allocation7] sm:$0xff] %vm55, %v146
    %149 = vst.msk [vmem:[#allocation7 + $0x8] sm:$0xff] %vm55, %v147
    %v150 = vld [vmem:[%s3] sm:$0x1]
    %v152 = vlaneseq
    %v153 = vshrl.u32 %v152, 7
    %v154 = vsub.s32 0, %v153
    %v155 = vrot.slane %v150, %v154
    %v157 = vadd.f32 %v129, %v155
    %v158 = vadd.f32 %v134, %v155
    %v159 = vmul.f32 %v157, 0.35355338
    %v160 = vmul.f32 %v158, 0.35355338
    %161 = vst.msk [vmem:[#allocation8] sm:$0xff] %vm55, %v159
    %162 = vst.msk [vmem:[#allocation8 + $0x8] sm:$0xff] %vm55, %v160
    // Predicated region
    $region26: #{tpu_custom_call.1} parent=1 // pred_check
      _
    $region27: #{tpu_custom_call.1} parent=1 // pred_check_branch
      %164 = sbr.rel (0) target = $region29
    $region28: #{tpu_custom_call.1} parent=1 // pred_region
      %s166 = ssub.s32 256, 256
      %167 = vsyncadd [#allocation4], %s166
      %s168 = sshll.u32 [#allocation7], 4
      %s169 = int_to_ptr.vmem [resolvable:$true] %s168
      %174 = dma.vmem_to_hbm [thread:$0]  %s169, 256, %s4, [#allocation4], 128, 128, 8
    $region29: #{tpu_custom_call.1} parent=1 // pred_fallthru
      _
    // Predicated region
    $region30: #{tpu_custom_call.1} parent=1 // pred_check
      _
    $region31: #{tpu_custom_call.1} parent=1 // pred_check_branch
      %176 = sbr.rel (0) target = $region33
    $region32: #{tpu_custom_call.1} parent=1 // pred_region
      %s178 = ssub.s32 256, 256
      %179 = vsyncadd [#allocation9], %s178
      %s180 = sshll.u32 [#allocation8], 4
      %s181 = int_to_ptr.vmem [resolvable:$true] %s180
      %186 = dma.vmem_to_hbm [thread:$0]  %s181, 256, %s5, [#allocation9], 128, 128, 8
    $region33: #{tpu_custom_call.1} parent=1 // pred_fallthru
      _
    // Predicated region
    $region34: #{tpu_custom_call.1} parent=1 // pred_check
      _
    $region35: #{tpu_custom_call.1} parent=1 // pred_check_branch
      %188 = sbr.rel (0) target = $region37
    $region36: #{tpu_custom_call.1} parent=1 // pred_region
      %189 = dma.done [#allocation4], 256
    $region37: #{tpu_custom_call.1} parent=1 // pred_fallthru
      _
    // Predicated region
    $region38: #{tpu_custom_call.1} parent=1 // pred_check
      _
    $region39: #{tpu_custom_call.1} parent=1 // pred_check_branch
      %191 = sbr.rel (0) target = $region41
    $region40: #{tpu_custom_call.1} parent=1 // pred_region
      %192 = dma.done [#allocation9], 256
    $region41: #{tpu_custom_call.1} parent=1 // pred_fallthru
      _
    %193 = vsyncpa [#allocation3], 1
    %194 = vsyncpa [#allocation6], 1
    %195 = vsyncpa [#allocation4], 1
    %196 = vsyncpa [#allocation9], 1

</llo_original>
